<compile_context>
chip_gen: v5e
topology: v5e:2x2
jax: 0.10.0
libtpu: 0.0.40
codegen_flags: <defaults>
</compile_context>

<pallas_src>
import jax
import jax.numpy as jnp
from jax import lax
from jax.experimental import pallas as pl
from jax.experimental.pallas import tpu as pltpu

# -------------------- synthetic config --------------------
VOCAB = 64
HIDDEN = 32        # config.hidden_size  (LLM hidden dim)
OUT_DIM = 16       # config.out_dim      (image feature channels)
NUM_CLS = 4        # config.num_cls
SEG_TOKEN_IDX = 5  # config.seg_token_idx

KP = 32            # padded conv contraction dim: 27 taps + 1 bias row + 4 zero rows
MAX_TILE = 2048    # spatial lane tile; 32x2048 bf16 + 8x2048 f32 double-buffered
                   # stays well under the 64 MiB VMEM budget of v7x.


# -------------------- Pallas kernels --------------------
def _text_kernel(x_ref, msel_ref, cnt_ref, w1_ref, b1_ref, w2_ref, b2_ref, o_ref):
    """Fused text path: MLLM-stub linear+tanh, [seg] masked mean (as a mask
    matmul on the MXU), and MultiModalFusion projection+relu. One launch."""
    h = jnp.tanh(
        jnp.dot(x_ref[...], w1_ref[...], preferred_element_type=jnp.float32)
        + b1_ref[...]
    )                                                     # (B*S, H) last_hidden
    wsum = jnp.dot(msel_ref[...], h, preferred_element_type=jnp.float32)  # (B, H)
    cnt = cnt_ref[...]                                    # (B, 1) #seg tokens / batch
    seg = jnp.where(cnt > 0.0, wsum / jnp.maximum(cnt, 1.0), 0.0)
    t = jnp.dot(seg, w2_ref[...], preferred_element_type=jnp.float32) + b2_ref[...]
    o_ref[...] = jnp.maximum(t, 0.0)                      # (B, OUT_DIM)


def _enc_dec_kernel(p_ref, t_ref, weT_ref, wdT_ref, bd_ref, o_ref):
    """Fused SAM encoder + text-conditioned decoder on one (batch, spatial) tile.

    p_ref:   (KP, tile)      bf16  im2col patches (row 27 = 1.0 bias row)
    t_ref:   (C, 1)          f32   projected text features for this batch item
    weT_ref: (C, KP)         bf16  encoder conv weight^T (bias folded)
    wdT_ref: (M, C)          bf16  decoder 1x1x1 conv weight^T
    bd_ref:  (M, 1)          f32   decoder bias
    o_ref:   (M, tile)       f32   mask logits (spatial on lanes -> NCDHW free)
    """
    feats = jnp.dot(weT_ref[...], p_ref[...], preferred_element_type=jnp.float32)
    feats = jnp.maximum(feats, 0.0)                       # encoder ReLU, (C, tile)
    mod = (feats * t_ref[...]).astype(jnp.bfloat16)       # FiLM text conditioning
    y = jnp.dot(wdT_ref[...], mod, preferred_element_type=jnp.float32)
    o_ref[...] = y + bd_ref[...]                          # (M, tile)


# -------------------- JAX glue: patches / weight packing --------------------
def _spatial_tiling(nsp, max_tile=MAX_TILE):
    tile = min(max_tile, pl.cdiv(nsp, 128) * 128)
    nsp_p = pl.cdiv(nsp, tile) * tile
    return tile, nsp_p


def extract_patches(image_ncdhw, max_tile=MAX_TILE):
    """NCDHW volume -> channel-major patch matrix (B, KP, Nsp_padded) in bf16."""
    # TODO(synk): at production volume sizes, fuse this halo'd patch extraction
    # into the encoder kernel (27 shifted in-VMEM reads) to avoid materializing
    # the ~27x-larger im2col matrix in HBM.
    patches = lax.conv_general_dilated_patches(
        image_ncdhw, filter_shape=(3, 3, 3), window_strides=(1, 1, 1),
        padding="SAME")                                    # (B, 27, D, H, W)
    B, K, D, H, W = patches.shape
    assert K == 27, "stand-in encoder expects a single input channel"
    nsp = D * H * W
    tile, nsp_p = _spatial_tiling(nsp, max_tile)
    patches = patches.reshape(B, K, nsp)
    ones = jnp.ones((B, 1, nsp), patches.dtype)            # bias row -> rides the MXU
    zeros = jnp.zeros((B, KP - K - 1, nsp), patches.dtype)
    patches = jnp.concatenate([patches, ones, zeros], axis=1)   # (B, KP, nsp)
    patches = jnp.pad(patches, ((0, 0), (0, 0), (0, nsp_p - nsp)))
    return patches.astype(jnp.bfloat16), (B, D, H, W, nsp, nsp_p, tile)


def _prep_encoder_weights(w, b):
    """(27, C) weight + (1, C) bias -> (C, KP) bf16 with bias folded at col 27."""
    C = w.shape[1]
    w_aug = jnp.concatenate(
        [w, b, jnp.zeros((KP - w.shape[0] - 1, C), w.dtype)], axis=0)   # (KP, C)
    return jnp.transpose(w_aug).astype(jnp.bfloat16)                    # (C, KP)


def _prep_decoder_weights(w, b):
    """(C, M) weight + (1, M) bias -> (M, C) bf16 weight^T and (M, 1) f32 bias."""
    return jnp.transpose(w).astype(jnp.bfloat16), jnp.transpose(b).astype(jnp.float32)


# -------------------- pallas_call wrappers --------------------
def process_text(params, text_tokens):
    # TODO(synk): the frozen LLaVA MLLM (+ optional LoRA) cannot be reproduced
    # without a checkpoint; a tiny embedding + linear stub stands in for it.
    emb = jnp.take(params["mllm_embed"], text_tokens, axis=0)      # (B, S, H)
    B, S, H = emb.shape
    x = emb.reshape(B * S, H)                                      # 2D for the MXU
    seg_mask = (text_tokens == SEG_TOKEN_IDX).astype(jnp.float32)  # (B, S)
    # Block-diagonal selection matrix so the [seg] masked mean is a matmul.
    eye = jnp.eye(B, dtype=jnp.float32)
    msel = (eye[:, :, None] * seg_mask[None, :, :]).reshape(B, B * S)   # (B, B*S)
    cnt = jnp.sum(seg_mask, axis=1, keepdims=True)                 # (B, 1)

    text_feats = pl.pallas_call(
        _text_kernel,
        out_shape=jax.ShapeDtypeStruct((B, OUT_DIM), jnp.float32),
    )(x, msel, cnt,
      params["mllm_w"], params["mllm_b"],
      params["fusion_w"], params["fusion_b"])
    return text_feats                                              # (B, OUT_DIM)


def fused_encode_decode(patches, t3, weT, wdT, bd, dims):
    """patches (B, KP, Nsp_p) bf16; t3 (B, C, 1) f32; weT (C, KP); wdT (M, C);
    bd (M, 1) -> mask logits (B, M, D, H, W) already in NCDHW order."""
    B, D, H, W, nsp, nsp_p, tile = dims
    C_tot = weT.shape[0]
    M_tot = wdT.shape[0]
    n_tiles = nsp_p // tile
    masks = pl.pallas_call(
        _enc_dec_kernel,
        out_shape=jax.ShapeDtypeStruct((B, M_tot, nsp_p), jnp.float32),
        grid=(B, n_tiles),
        in_specs=[
            pl.BlockSpec((None, KP, tile), lambda b, j: (b, 0, j)),
            pl.BlockSpec((None, C_tot, 1), lambda b, j: (b, 0, 0)),
            pl.BlockSpec((C_tot, KP), lambda b, j: (0, 0)),
            pl.BlockSpec((M_tot, C_tot), lambda b, j: (0, 0)),
            pl.BlockSpec((M_tot, 1), lambda b, j: (0, 0)),
        ],
        out_specs=pl.BlockSpec((None, M_tot, tile), lambda b, j: (b, 0, j)),
        compiler_params=pltpu.CompilerParams(
            dimension_semantics=("parallel", "parallel")),
    )(patches, t3, weT, wdT, bd)
    return masks[:, :, :nsp].reshape(B, M_tot, D, H, W)            # NCDHW, no transpose


# -------------------- model forward --------------------
def lisa3d_forward(params, image, text_tokens, is_labeled=True):
    text_feats = process_text(params, text_tokens)                 # (B, OUT_DIM)
    patches, dims = extract_patches(image)

    weT_l = _prep_encoder_weights(params["enc_l_w"], params["enc_l_b"])
    wdT_l, bd_l = _prep_decoder_weights(params["dec_l_w"], params["dec_l_b"])

    if is_labeled:
        t3 = text_feats[:, :, None]                                # (B, C, 1)
        return fused_encode_decode(patches, t3, weT_l, wdT_l, bd_l, dims)

    # Unlabeled path: run both (encoder_l -> decoder_l) and (encoder_u ->
    # decoder_u) in ONE fused pass over the shared patches by concatenating
    # encoder weights and block-diagonalizing the decoder heads.
    weT_u = _prep_encoder_weights(params["enc_u_w"], params["enc_u_b"])
    wdT_u, bd_u = _prep_decoder_weights(params["dec_u_w"], params["dec_u_b"])

    weT_all = jnp.concatenate([weT_l, weT_u], axis=0)              # (2C, KP)
    z = jnp.zeros_like(wdT_l)
    wdT_all = jnp.concatenate(
        [jnp.concatenate([wdT_l, z], axis=1),
         jnp.concatenate([z, wdT_u], axis=1)], axis=0)             # (2M, 2C)
    bd_all = jnp.concatenate([bd_l, bd_u], axis=0)                 # (2M, 1)
    t3 = jnp.concatenate([text_feats, text_feats], axis=1)[:, :, None]  # (B, 2C, 1)

    masks_all = fused_encode_decode(patches, t3, weT_all, wdT_all, bd_all, dims)
    pseudo_masks = lax.stop_gradient(masks_all[:, :NUM_CLS])       # torch.no_grad branch
    pred_masks = masks_all[:, NUM_CLS:]
    return pseudo_masks, pred_masks


# -------------------- deterministic parameter init --------------------
def init_params(key):
    ks = jax.random.split(key, 8)
    k_conv = 3 * 3 * 3  # 27, single input channel
    # kaiming_normal_(mode='fan_out', relu): std = sqrt(2 / fan_out)
    conv_std_enc = (2.0 / (OUT_DIM * k_conv)) ** 0.5
    conv_std_dec = (2.0 / (NUM_CLS * 1)) ** 0.5
    return {
        # MLLM stub (frozen in the reference model)
        "mllm_embed": 0.02 * jax.random.normal(ks[0], (VOCAB, HIDDEN), jnp.float32),
        "mllm_w": 0.01 * jax.random.normal(ks[1], (HIDDEN, HIDDEN), jnp.float32),
        "mllm_b": jnp.zeros((1, HIDDEN), jnp.float32),
        # MultiModalFusion (Linear init: std=0.01, bias=0)
        "fusion_w": 0.01 * jax.random.normal(ks[2], (HIDDEN, OUT_DIM), jnp.float32),
        "fusion_b": jnp.zeros((1, OUT_DIM), jnp.float32),
        # SAMEncoder3D (labeled / unlabeled branches), conv bias = 0
        "enc_l_w": conv_std_enc * jax.random.normal(ks[3], (k_conv, OUT_DIM), jnp.float32),
        "enc_l_b": jnp.zeros((1, OUT_DIM), jnp.float32),
        "enc_u_w": conv_std_enc * jax.random.normal(ks[4], (k_conv, OUT_DIM), jnp.float32),
        "enc_u_b": jnp.zeros((1, OUT_DIM), jnp.float32),
        # SAMDecoder3D heads (out_dim -> num_cls), conv bias = 0
        "dec_l_w": conv_std_dec * jax.random.normal(ks[5], (OUT_DIM, NUM_CLS), jnp.float32),
        "dec_l_b": jnp.zeros((1, NUM_CLS), jnp.float32),
        "dec_u_w": conv_std_dec * jax.random.normal(ks[6], (OUT_DIM, NUM_CLS), jnp.float32),
        "dec_u_b": jnp.zeros((1, NUM_CLS), jnp.float32),
    }


# -------------------- main --------------------
if __name__ == "__main__":
    key = jax.random.PRNGKey(0)
    k_params, k_img, k_tok = jax.random.split(key, 3)

    params = init_params(k_params)

    # image: NCDHW 3D volume, text_tokens: (B, S) token ids
    B, C_in, D, H, W, S = 2, 1, 4, 8, 8, 8
    image = jax.random.normal(k_img, (B, C_in, D, H, W), jnp.float32)
    text_tokens = jax.random.randint(k_tok, (B, S), 0, VOCAB, jnp.int32)
    # make sure [seg] tokens are present (one per batch item)
    text_tokens = text_tokens.at[:, 3].set(SEG_TOKEN_IDX)

    fwd = jax.jit(lisa3d_forward, static_argnames=("is_labeled",))

    # labeled path
    masks = jax.block_until_ready(fwd(params, image, text_tokens, is_labeled=True))
    assert masks.shape == (B, NUM_CLS, D, H, W)

    # unlabeled path (pseudo + predicted masks)
    pseudo, pred = fwd(params, image, text_tokens, is_labeled=False)
    jax.block_until_ready((pseudo, pred))
    assert pseudo.shape == (B, NUM_CLS, D, H, W)
    assert pred.shape == (B, NUM_CLS, D, H, W)

    print("KERNEL_OK")
</pallas_src>

<mosaic_0001>
module attributes {stable_mosaic.version = 11 : i64} {
  func.func @_text_kernel(%arg0: memref<16x32xf32, #tpu.memory_space<vmem>>, %arg1: memref<2x16xf32, #tpu.memory_space<vmem>>, %arg2: memref<2x1xf32, #tpu.memory_space<vmem>>, %arg3: memref<32x32xf32, #tpu.memory_space<vmem>>, %arg4: memref<1x32xf32, #tpu.memory_space<vmem>>, %arg5: memref<32x16xf32, #tpu.memory_space<vmem>>, %arg6: memref<1x16xf32, #tpu.memory_space<vmem>>, %arg7: memref<2x16xf32, #tpu.memory_space<vmem>>) attributes {dimension_semantics = [], scalar_prefetch = 0 : i64, scratch_operands = 0 : i64, tpu.core_type = #tpu.core_type<tc>} {
    %c0 = arith.constant 0 : index
    %c0_0 = arith.constant 0 : index
    %0 = vector.load %arg0[%c0, %c0_0] : memref<16x32xf32, #tpu.memory_space<vmem>>, vector<16x32xf32>
    %c0_1 = arith.constant 0 : index
    %c0_2 = arith.constant 0 : index
    %1 = vector.load %arg3[%c0_1, %c0_2] : memref<32x32xf32, #tpu.memory_space<vmem>>, vector<32x32xf32>
    %cst = arith.constant dense<0.000000e+00> : vector<16x32xf32>
    %2 = tpu.matmul %0, %1, %cst {dimension_numbers = #tpu.dot_dimension_numbers<[1], [0], [0], [1], [0, 0, 1, 1], [], []>} : vector<16x32xf32>, vector<32x32xf32>, vector<16x32xf32> -> vector<16x32xf32>
    %c0_3 = arith.constant 0 : index
    %c0_4 = arith.constant 0 : index
    %3 = vector.load %arg4[%c0_3, %c0_4] : memref<1x32xf32, #tpu.memory_space<vmem>>, vector<1x32xf32>
    %4 = vector.broadcast %3 : vector<1x32xf32> to vector<16x32xf32>
    %5 = arith.addf %2, %4 : vector<16x32xf32>
    %6 = math.tanh %5 : vector<16x32xf32>
    %c0_5 = arith.constant 0 : index
    %c0_6 = arith.constant 0 : index
    %7 = vector.load %arg1[%c0_5, %c0_6] : memref<2x16xf32, #tpu.memory_space<vmem>>, vector<2x16xf32>
    %cst_7 = arith.constant dense<0.000000e+00> : vector<2x32xf32>
    %8 = tpu.matmul %7, %6, %cst_7 {dimension_numbers = #tpu.dot_dimension_numbers<[1], [0], [0], [1], [0, 0, 1, 1], [], []>} : vector<2x16xf32>, vector<16x32xf32>, vector<2x32xf32> -> vector<2x32xf32>
    %c0_8 = arith.constant 0 : index
    %c0_9 = arith.constant 0 : index
    %9 = vector.load %arg2[%c0_8, %c0_9] : memref<2x1xf32, #tpu.memory_space<vmem>>, vector<2x1xf32>
    %cst_10 = arith.constant 0.000000e+00 : f32
    %10 = vector.broadcast %cst_10 : f32 to vector<2x1xf32>
    %11 = arith.cmpf ogt, %9, %10 : vector<2x1xf32>
    %cst_11 = arith.constant 1.000000e+00 : f32
    %12 = vector.broadcast %cst_11 : f32 to vector<2x1xf32>
    %13 = arith.maximumf %9, %12 : vector<2x1xf32>
    %14 = vector.broadcast %13 : vector<2x1xf32> to vector<2x32xf32>
    %15 = arith.divf %8, %14 : vector<2x32xf32>
    %cst_12 = arith.constant 0.000000e+00 : f32
    %16 = vector.shape_cast %11 : vector<2x1xi1> to vector<2x1xi1>
    %17 = vector.broadcast %16 : vector<2x1xi1> to vector<2x32xi1>
    %18 = vector.broadcast %cst_12 : f32 to vector<2x32xf32>
    %19 = arith.select %17, %15, %18 : vector<2x32xi1>, vector<2x32xf32>
    %c0_13 = arith.constant 0 : index
    %c0_14 = arith.constant 0 : index
    %20 = vector.load %arg5[%c0_13, %c0_14] : memref<32x16xf32, #tpu.memory_space<vmem>>, vector<32x16xf32>
    %cst_15 = arith.constant dense<0.000000e+00> : vector<2x16xf32>
    %21 = tpu.matmul %19, %20, %cst_15 {dimension_numbers = #tpu.dot_dimension_numbers<[1], [0], [0], [1], [0, 0, 1, 1], [], []>} : vector<2x32xf32>, vector<32x16xf32>, vector<2x16xf32> -> vector<2x16xf32>
    %c0_16 = arith.constant 0 : index
    %c0_17 = arith.constant 0 : index
    %22 = vector.load %arg6[%c0_16, %c0_17] : memref<1x16xf32, #tpu.memory_space<vmem>>, vector<1x16xf32>
    %23 = vector.broadcast %22 : vector<1x16xf32> to vector<2x16xf32>
    %24 = arith.addf %21, %23 : vector<2x16xf32>
    %cst_18 = arith.constant 0.000000e+00 : f32
    %25 = vector.broadcast %cst_18 : f32 to vector<2x16xf32>
    %26 = arith.maximumf %24, %25 : vector<2x16xf32>
    %c0_19 = arith.constant 0 : index
    %c0_20 = arith.constant 0 : index
    %27 = vector.load %arg7[%c0_19, %c0_20] : memref<2x16xf32, #tpu.memory_space<vmem>>, vector<2x16xf32>
    tpu.vector_store %arg7[%c0_19, %c0_20], %26 {strides = array<i32>} : memref<2x16xf32, #tpu.memory_space<vmem>>, vector<2x16xf32>,
    return
  }
}

module attributes {stable_mosaic.version = 11 : i64} {
  func.func @_enc_dec_kernel(%arg0: i32, %arg1: i32, %arg2: memref<1x32x256xbf16, #tpu.memory_space<vmem>>, %arg3: memref<1x16x1xf32, #tpu.memory_space<vmem>>, %arg4: memref<16x32xbf16, #tpu.memory_space<vmem>>, %arg5: memref<4x16xbf16, #tpu.memory_space<vmem>>, %arg6: memref<4x1xf32, #tpu.memory_space<vmem>>, %arg7: memref<1x4x256xf32, #tpu.memory_space<vmem>>) attributes {dimension_semantics = [#tpu.dimension_semantics<parallel>, #tpu.dimension_semantics<parallel>], iteration_bounds = array<i64: 2, 1>, scalar_prefetch = 0 : i64, scratch_operands = 0 : i64, tpu.core_type = #tpu.core_type<tc>, window_params = [{transform_indices = @transform_0, window_bounds = array<i64: 1, 32, 256>}, {transform_indices = @transform_1, window_bounds = array<i64: 1, 16, 1>}, {pipeline_mode = #tpu.pipeline_mode<synchronous>, transform_indices = @transform_2, window_bounds = array<i64: 16, 32>}, {pipeline_mode = #tpu.pipeline_mode<synchronous>, transform_indices = @transform_3, window_bounds = array<i64: 4, 16>}, {pipeline_mode = #tpu.pipeline_mode<synchronous>, transform_indices = @transform_4, window_bounds = array<i64: 4, 1>}, {transform_indices = @transform_5, window_bounds = array<i64: 1, 4, 256>}]} {
    %c0 = arith.constant 0 : index
    %c0_0 = arith.constant 0 : index
    %0 = vector.load %arg4[%c0, %c0_0] : memref<16x32xbf16, #tpu.memory_space<vmem>>, vector<16x32xbf16>
    %c0_1 = arith.constant 0 : index
    %c0_2 = arith.constant 0 : index
    %c0_3 = arith.constant 0 : index
    %1 = vector.load %arg2[%c0_1, %c0_2, %c0_3] : memref<1x32x256xbf16, #tpu.memory_space<vmem>>, vector<1x32x256xbf16>
    %2 = vector.shape_cast %1 : vector<1x32x256xbf16> to vector<32x256xbf16>
    %cst = arith.constant dense<0.000000e+00> : vector<16x256xf32>
    %3 = tpu.matmul %0, %2, %cst {dimension_numbers = #tpu.dot_dimension_numbers<[1], [0], [0], [1], [0, 0, 1, 1], [], []>} : vector<16x32xbf16>, vector<32x256xbf16>, vector<16x256xf32> -> vector<16x256xf32>
    %cst_4 = arith.constant 0.000000e+00 : f32
    %4 = vector.broadcast %cst_4 : f32 to vector<16x256xf32>
    %5 = arith.maximumf %3, %4 : vector<16x256xf32>
    %c0_5 = arith.constant 0 : index
    %c0_6 = arith.constant 0 : index
    %c0_7 = arith.constant 0 : index
    %6 = vector.load %arg3[%c0_5, %c0_6, %c0_7] : memref<1x16x1xf32, #tpu.memory_space<vmem>>, vector<1x16x1xf32>
    %7 = vector.shape_cast %6 : vector<1x16x1xf32> to vector<16x1xf32>
    %8 = vector.broadcast %7 : vector<16x1xf32> to vector<16x256xf32>
    %9 = arith.mulf %5, %8 : vector<16x256xf32>
    %10 = arith.truncf %9 : vector<16x256xf32> to vector<16x256xbf16>
    %c0_8 = arith.constant 0 : index
    %c0_9 = arith.constant 0 : index
    %11 = vector.load %arg5[%c0_8, %c0_9] : memref<4x16xbf16, #tpu.memory_space<vmem>>, vector<4x16xbf16>
    %cst_10 = arith.constant dense<0.000000e+00> : vector<4x256xf32>
    %12 = tpu.matmul %11, %10, %cst_10 {dimension_numbers = #tpu.dot_dimension_numbers<[1], [0], [0], [1], [0, 0, 1, 1], [], []>} : vector<4x16xbf16>, vector<16x256xbf16>, vector<4x256xf32> -> vector<4x256xf32>
    %c0_11 = arith.constant 0 : index
    %c0_12 = arith.constant 0 : index
    %13 = vector.load %arg6[%c0_11, %c0_12] : memref<4x1xf32, #tpu.memory_space<vmem>>, vector<4x1xf32>
    %14 = vector.broadcast %13 : vector<4x1xf32> to vector<4x256xf32>
    %15 = arith.addf %12, %14 : vector<4x256xf32>
    %c0_13 = arith.constant 0 : index
    %c0_14 = arith.constant 0 : index
    %c0_15 = arith.constant 0 : index
    %16 = vector.load %arg7[%c0_13, %c0_14, %c0_15] : memref<1x4x256xf32, #tpu.memory_space<vmem>>, vector<1x4x256xf32>
    %17 = vector.shape_cast %16 : vector<1x4x256xf32> to vector<4x256xf32>
    %18 = vector.shape_cast %15 : vector<4x256xf32> to vector<1x4x256xf32>
    tpu.vector_store %arg7[%c0_13, %c0_14, %c0_15], %18 {strides = array<i32>} : memref<1x4x256xf32, #tpu.memory_space<vmem>>, vector<1x4x256xf32>,
    return
  }
  func.func @transform_0(%arg0: i32, %arg1: i32) -> (i32, i32, i32) {
    %c0_i32 = arith.constant 0 : i32
    %c0_i32_0 = arith.constant 0 : i32
    return %arg0, %c0_i32, %arg1 : i32, i32, i32
  }
  func.func @transform_1(%arg0: i32, %arg1: i32) -> (i32, i32, i32) {
    %c0_i32 = arith.constant 0 : i32
    %c0_i32_0 = arith.constant 0 : i32
    %c0_i32_1 = arith.constant 0 : i32
    return %arg0, %c0_i32, %c0_i32_0 : i32, i32, i32
  }
  func.func @transform_2(%arg0: i32, %arg1: i32) -> (i32, i32) {
    %c0_i32 = arith.constant 0 : i32
    %c0_i32_0 = arith.constant 0 : i32
    %c0_i32_1 = arith.constant 0 : i32
    return %c0_i32, %c0_i32_0 : i32, i32
  }
  func.func @transform_3(%arg0: i32, %arg1: i32) -> (i32, i32) {
    %c0_i32 = arith.constant 0 : i32
    %c0_i32_0 = arith.constant 0 : i32
    %c0_i32_1 = arith.constant 0 : i32
    return %c0_i32, %c0_i32_0 : i32, i32
  }
  func.func @transform_4(%arg0: i32, %arg1: i32) -> (i32, i32) {
    %c0_i32 = arith.constant 0 : i32
    %c0_i32_0 = arith.constant 0 : i32
    %c0_i32_1 = arith.constant 0 : i32
    return %c0_i32, %c0_i32_0 : i32, i32
  }
  func.func @transform_5(%arg0: i32, %arg1: i32) -> (i32, i32, i32) {
    %c0_i32 = arith.constant 0 : i32
    %c0_i32_0 = arith.constant 0 : i32
    return %arg0, %c0_i32, %arg1 : i32, i32, i32
  }
}

</mosaic_0001>

<llo_original>
// kernel: lisa3d_forward.3
$region0: #{lisa3d_forward.3}
  #allocation0 [shape = 'u32[]', space=smem, size = 0x4, offset = 0x4, fixed_abs, tag = 'smem constant byte address 0x4 - core index']
  #allocation1 [shape = 'u32[72,128]{1,0:T(1,128)}', space=vmem, size = 0x9000, scoped, tag = 'internal scratch']
  %s0 = inlined_call_operand.vmem [shape: bf16[2,32,256], index: 0, kind: input, shape index: {}]
  %s1 = inlined_call_operand.vmem [shape: f32[2,16,1], index: 1, kind: input, shape index: {}]
  %s2 = inlined_call_operand.vmem [shape: bf16[16,32], index: 2, kind: input, shape index: {}]
  %s3 = inlined_call_operand.vmem [shape: bf16[4,16], index: 3, kind: input, shape index: {}]
  %s4 = inlined_call_operand.vmem [shape: f32[4,1], index: 4, kind: input, shape index: {}]
  %s5 = inlined_call_operand.vmem [shape: f32[2,4,256], index: 5, kind: output, shape index: {}]
  %s6 = sld [smem:[#allocation0]]
  $region53: #{lisa3d_forward.3} parent=0
    _
  %s8 = ssub.s32 1, %s6
  %s9 = scalar_select 0, %s8, %s6
  loop: start=0, step=1, limit=4
  $region2: #{lisa3d_forward.3} parent=0 // loop_pre_header
    _
  $region3: #{lisa3d_forward.3} parent=0 // loop_header
    %s11 = sphi 0, %s15
    %p12 = scmp.ge.s32.totalorder %s11, 4
    %s18 = sphi 0, %s30
    %s19 = sphi 0, %s26
    %s20 = sphi 0, %s18
    %s21 = sphi 0, %s19
    %s22 = sphi 0, %s20
    %s23 = sphi 0, %s21
    %s35 = sphi 0, %s37
    %s38 = sphi 0, %s35
    %s39 = sphi 0, %s38
    %s55 = sphi 0, %s39
    %s61 = sphi 0, %s63
    %s64 = sphi 0, %s61
    %s65 = sphi 0, %s64
    %s81 = sphi 0, %s65
    %s85 = sphi 0, %s85
    %s87 = sphi 0, %s85
    %s88 = sphi 0, %s87
    %s102 = sphi 0, %s88
    %s106 = sphi 0, %s106
    %s108 = sphi 0, %s106
    %s109 = sphi 0, %s108
    %s123 = sphi 0, %s109
    %s127 = sphi 0, %s127
    %s129 = sphi 0, %s127
    %s130 = sphi 0, %s129
    %s144 = sphi 0, %s130
    %s152 = sphi 0, %s154
    %s155 = sphi 0, %s152
    %s156 = sphi 0, %s155
    %s172 = sphi 0, %s156
  $region4: #{lisa3d_forward.3} parent=0 // loop_header_branch
    %14 = sbr.rel (%p12) target = $region8
  $region5: #{lisa3d_forward.3} parent=0 // loop_body
    %s16 = ssub.s32 %s11, 1
    %s17 = ssub.s32 %s11, 2
    %s24 = sadd.s32 1, %s19
    %p25 = scmp.ge.s32.totalorder %s24, 1
    %s26 = scalar_select %p25, 0, %s24
    %s27 = sadd.s32 1, %s18
    %s28 = scalar_select %p25, %s27, %s18
    %p29 = scmp.ge.s32.totalorder %s28, 2
    %s30 = scalar_select %p29, 0, %s28
    %s31 = ssub.s32 %s18, %s30
    %s32 = ssub.s32 %s19, %s26
    %s33 = sor.u32 %s31, %s32
    %p34 = scmp.eq.s32.totalorder %s33, 0
    %s36 = sadd.s32 %s35, 1
    %s37 = scalar_select %p34, %s35, %s36
    %p40 = pneg %p34
    %p41 = scmp.eq.s32.totalorder %s11, 1
    %p42 = por %p40, %p41
    %p43 = scmp.ne.s32.totalorder %s35, %s38
    %p44 = scmp.eq.s32.totalorder %s11, 0
    %p45 = por %p43, %p44
    %p46 = scmp.ne.s32.totalorder %s35, %s38
    %p47 = scmp.eq.s32.totalorder %s16, 1
    %p48 = por %p46, %p47
    %p49 = scmp.ne.s32.totalorder %s38, %s39
    %p50 = scmp.eq.s32.totalorder %s16, 0
    %p51 = por %p49, %p50
    %p52 = scmp.ne.s32.totalorder %s38, %s39
    %p53 = scmp.eq.s32.totalorder %s17, 1
    %p54 = por %p52, %p53
    %p56 = scmp.ne.s32.totalorder %s39, %s55
    %p57 = scmp.eq.s32.totalorder %s17, 0
    %p58 = por %p56, %p57
    %s59 = ssub.s32 %s18, %s30
    %p60 = scmp.eq.s32.totalorder %s59, 0
    %s62 = sadd.s32 %s61, 1
    %s63 = scalar_select %p60, %s61, %s62
    %p66 = pneg %p60
    %p67 = scmp.eq.s32.totalorder %s11, 1
    %p68 = por %p66, %p67
    %p69 = scmp.ne.s32.totalorder %s61, %s64
    %p70 = scmp.eq.s32.totalorder %s11, 0
    %p71 = por %p69, %p70
    %p72 = scmp.ne.s32.totalorder %s61, %s64
    %p73 = scmp.eq.s32.totalorder %s16, 1
    %p74 = por %p72, %p73
    %p75 = scmp.ne.s32.totalorder %s64, %s65
    %p76 = scmp.eq.s32.totalorder %s16, 0
    %p77 = por %p75, %p76
    %p78 = scmp.ne.s32.totalorder %s64, %s65
    %p79 = scmp.eq.s32.totalorder %s17, 1
    %p80 = por %p78, %p79
    %p82 = scmp.ne.s32.totalorder %s65, %s81
    %p83 = scmp.eq.s32.totalorder %s17, 0
    %p84 = por %p82, %p83
    %s86 = sadd.s32 %s85, 1
    %p89 = scmp.eq.s32.totalorder %s11, 1
    %p90 = scmp.ne.s32.totalorder %s85, %s87
    %p91 = scmp.eq.s32.totalorder %s11, 0
    %p92 = por %p90, %p91
    %p93 = scmp.ne.s32.totalorder %s85, %s87
    %p94 = scmp.eq.s32.totalorder %s16, 1
    %p95 = por %p93, %p94
    %p96 = scmp.ne.s32.totalorder %s87, %s88
    %p97 = scmp.eq.s32.totalorder %s16, 0
    %p98 = por %p96, %p97
    %p99 = scmp.ne.s32.totalorder %s87, %s88
    %p100 = scmp.eq.s32.totalorder %s17, 1
    %p101 = por %p99, %p100
    %p103 = scmp.ne.s32.totalorder %s88, %s102
    %p104 = scmp.eq.s32.totalorder %s17, 0
    %p105 = por %p103, %p104
    %s107 = sadd.s32 %s106, 1
    %p110 = scmp.eq.s32.totalorder %s11, 1
    %p111 = scmp.ne.s32.totalorder %s106, %s108
    %p112 = scmp.eq.s32.totalorder %s11, 0
    %p113 = por %p111, %p112
    %p114 = scmp.ne.s32.totalorder %s106, %s108
    %p115 = scmp.eq.s32.totalorder %s16, 1
    %p116 = por %p114, %p115
    %p117 = scmp.ne.s32.totalorder %s108, %s109
    %p118 = scmp.eq.s32.totalorder %s16, 0
    %p119 = por %p117, %p118
    %p120 = scmp.ne.s32.totalorder %s108, %s109
    %p121 = scmp.eq.s32.totalorder %s17, 1
    %p122 = por %p120, %p121
    %p124 = scmp.ne.s32.totalorder %s109, %s123
    %p125 = scmp.eq.s32.totalorder %s17, 0
    %p126 = por %p124, %p125
    %s128 = sadd.s32 %s127, 1
    %p131 = scmp.eq.s32.totalorder %s11, 1
    %p132 = scmp.ne.s32.totalorder %s127, %s129
    %p133 = scmp.eq.s32.totalorder %s11, 0
    %p134 = por %p132, %p133
    %p135 = scmp.ne.s32.totalorder %s127, %s129
    %p136 = scmp.eq.s32.totalorder %s16, 1
    %p137 = por %p135, %p136
    %p138 = scmp.ne.s32.totalorder %s129, %s130
    %p139 = scmp.eq.s32.totalorder %s16, 0
    %p140 = por %p138, %p139
    %p141 = scmp.ne.s32.totalorder %s129, %s130
    %p142 = scmp.eq.s32.totalorder %s17, 1
    %p143 = por %p141, %p142
    %p145 = scmp.ne.s32.totalorder %s130, %s144
    %p146 = scmp.eq.s32.totalorder %s17, 0
    %p147 = por %p145, %p146
    %s148 = ssub.s32 %s18, %s30
    %s149 = ssub.s32 %s19, %s26
    %s150 = sor.u32 %s148, %s149
    %p151 = scmp.eq.s32.totalorder %s150, 0
    %s153 = sadd.s32 %s152, 1
    %s154 = scalar_select %p151, %s152, %s153
    %p157 = pneg %p151
    %p158 = scmp.eq.s32.totalorder %s11, 1
    %p159 = por %p157, %p158
    %p160 = scmp.ne.s32.totalorder %s152, %s155
    %p161 = scmp.eq.s32.totalorder %s11, 0
    %p162 = por %p160, %p161
    %p163 = scmp.ne.s32.totalorder %s152, %s155
    %p164 = scmp.eq.s32.totalorder %s16, 1
    %p165 = por %p163, %p164
    %p166 = scmp.ne.s32.totalorder %s155, %s156
    %p167 = scmp.eq.s32.totalorder %s16, 0
    %p168 = por %p166, %p167
    %p169 = scmp.ne.s32.totalorder %s155, %s156
    %p170 = scmp.eq.s32.totalorder %s17, 1
    %p171 = por %p169, %p170
    %p173 = scmp.ne.s32.totalorder %s156, %s172
    %p174 = scmp.eq.s32.totalorder %s17, 0
    %p175 = por %p173, %p174
    %p176 = scmp.le.s32.totalorder 1, %s11
    %p177 = scmp.lt.s32.totalorder %s11, 3
    %p178 = pnand %p176, %p177
    %p179 = pneg %p178
    // Predicated region
    $region9: #{lisa3d_forward.3} parent=5 // pred_check
      _
    $region10: #{lisa3d_forward.3} parent=5 // pred_check_branch
      %181 = sbr.rel (%p178) target = $region12
    $region11: #{lisa3d_forward.3} parent=5 // pred_region
      %s182 = ssub.s32 %s11, 1
      // Predicated region
      $region13: #{lisa3d_forward.3} parent=11 // pred_check
        %p183 = pneg %p98
      $region14: #{lisa3d_forward.3} parent=11 // pred_check_branch
        %185 = sbr.rel (%p183) target = $region16
      $region15: #{lisa3d_forward.3} parent=11 // pred_region
        _
      $region16: #{lisa3d_forward.3} parent=11 // pred_fallthru
        _
      // Predicated region
      $region17: #{lisa3d_forward.3} parent=11 // pred_check
        %p186 = pneg %p119
      $region18: #{lisa3d_forward.3} parent=11 // pred_check_branch
        %188 = sbr.rel (%p186) target = $region20
      $region19: #{lisa3d_forward.3} parent=11 // pred_region
        _
      $region20: #{lisa3d_forward.3} parent=11 // pred_fallthru
        _
      // Predicated region
      $region21: #{lisa3d_forward.3} parent=11 // pred_check
        %p189 = pneg %p140
      $region22: #{lisa3d_forward.3} parent=11 // pred_check_branch
        %191 = sbr.rel (%p189) target = $region24
      $region23: #{lisa3d_forward.3} parent=11 // pred_region
        _
      $region24: #{lisa3d_forward.3} parent=11 // pred_fallthru
        _
    $region12: #{lisa3d_forward.3} parent=5 // pred_fallthru
      _
    %p192 = scmp.lt.s32.totalorder %s11, 2
    // Predicated region
    $region25: #{lisa3d_forward.3} parent=5 // pred_check
      %p193 = pneg %p192
    $region26: #{lisa3d_forward.3} parent=5 // pred_check_branch
      %195 = sbr.rel (%p193) target = $region28
    $region27: #{lisa3d_forward.3} parent=5 // pred_region
      // Predicated region
      $region29: #{lisa3d_forward.3} parent=27 // pred_check
        %p196 = pneg %p45
      $region30: #{lisa3d_forward.3} parent=27 // pred_check_branch
        %198 = sbr.rel (%p196) target = $region32
      $region31: #{lisa3d_forward.3} parent=27 // pred_region
        %s199 = smul.u32 2, %s19
        %p200 = scmp.lt.s32.totalorder %s18, 1
        %s201 = scalar_select %p200, %s18, 1
        %p202 = scmp.lt.s32.totalorder %s199, 1
        %s203 = scalar_select %p202, %s199, 1
        %s204 = smul.addr %s201, 8
        %s205 = sadd.s32 %s203, %s204
        %s206 = smul.addr %s205, 4
        %s207 = scalar_lea.vmem %s0, %s206
        %s208 = smul.u32 2, %s19
      $region32: #{lisa3d_forward.3} parent=27 // pred_fallthru
        _
      // Predicated region
      $region33: #{lisa3d_forward.3} parent=27 // pred_check
        %p209 = pneg %p71
      $region34: #{lisa3d_forward.3} parent=27 // pred_check_branch
        %211 = sbr.rel (%p209) target = $region36
      $region35: #{lisa3d_forward.3} parent=27 // pred_region
        %p212 = scmp.lt.s32.totalorder %s18, 1
        %s213 = scalar_select %p212, %s18, 1
        %s214 = smul.addr %s213, 2
        %s215 = smul.addr %s214, 8
        %s216 = scalar_lea.vmem %s1, %s215
      $region36: #{lisa3d_forward.3} parent=27 // pred_fallthru
        _
    $region28: #{lisa3d_forward.3} parent=5 // pred_fallthru
      _
    %p217 = scmp.le.s32.totalorder 1, %s11
    %p218 = scmp.lt.s32.totalorder %s11, 3
    %p219 = pnand %p217, %p218
    %p220 = pneg %p219
    // Predicated region
    $region37: #{lisa3d_forward.3} parent=5 // pred_check
      _
    $region38: #{lisa3d_forward.3} parent=5 // pred_check_branch
      %222 = sbr.rel (%p219) target = $region40
    $region39: #{lisa3d_forward.3} parent=5 // pred_region
      %s223 = ssub.s32 %s11, 1
      %s224 = smul.u32 2, %s21
      %p225 = scmp.lt.s32.totalorder %s20, 1
      %s226 = scalar_select %p225, %s20, 1
      %p227 = scmp.lt.s32.totalorder %s224, 1
      %s228 = scalar_select %p227, %s224, 1
      %s229 = smul.addr %s226, 8
      %s230 = sadd.s32 %s228, %s229
      %s231 = smul.addr %s230, 4
      %s232 = scalar_lea.vmem %s0, %s231
      %p233 = pneg %p51
      %p234 = pneg %p48
      %p235 = scmp.lt.s32.totalorder %s20, 1
      %s236 = scalar_select %p235, %s20, 1
      %s237 = smul.addr %s236, 2
      %s238 = smul.addr %s237, 8
      %s239 = scalar_lea.vmem %s1, %s238
      %p240 = pneg %p77
      %p241 = pneg %p74
      %p242 = pneg %p98
      %p243 = pneg %p95
      %p244 = pneg %p119
      %p245 = pneg %p116
      %p246 = pneg %p140
      %p247 = pneg %p137
      %p248 = pneg %p168
      %p249 = pneg %p165
      %s250 = smul.u32 2, %s21
      %p251 = scmp.lt.s32.totalorder %s20, 1
      %s252 = scalar_select %p251, %s20, 1
      %p253 = scmp.lt.s32.totalorder %s250, 1
      %s254 = scalar_select %p253, %s250, 1
      %s255 = smul.addr %s252, 2
      %s256 = sadd.s32 %s254, %s255
      %s257 = smul.addr %s256, 4
      %s258 = scalar_lea.vmem %s5, %s257
      %s259 = smul.u32 2, %s21
      %p260 = scmp.lt.s32.totalorder %s20, 1
      %s261 = scalar_select %p260, %s20, 1
      %p262 = scmp.lt.s32.totalorder %s259, 1
      %s263 = scalar_select %p262, %s259, 1
      %s264 = smul.addr %s261, 8
      %s265 = sadd.s32 %s263, %s264
      %s266 = smul.addr %s265, 4
      %s267 = scalar_lea.vmem %s0, %s266
      %s268 = smul.u32 2, %s21
      %p269 = scmp.lt.s32.totalorder %s20, 1
      %s270 = scalar_select %p269, %s20, 1
      %s271 = smul.addr %s270, 2
      %s272 = smul.addr %s271, 8
      %s273 = scalar_lea.vmem %s1, %s272
      %s274 = smul.u32 2, %s21
      %p275 = scmp.lt.s32.totalorder %s20, 1
      %s276 = scalar_select %p275, %s20, 1
      %p277 = scmp.lt.s32.totalorder %s274, 1
      %s278 = scalar_select %p277, %s274, 1
      %s279 = smul.addr %s276, 2
      %s280 = sadd.s32 %s278, %s279
      %s281 = smul.addr %s280, 4
      %s282 = scalar_lea.vmem %s5, %s281
      %s283 = smul.u32 2, %s21
      %v285 = vld [vmem:[%s2] sm:$0xf]
      %v286 = vld [vmem:[%s2 + $0x4] sm:$0xf]
      %v287 = vld [vmem:[%s267] sm:$0xff]
      %v288 = vld [vmem:[%s267 + $0x8] sm:$0xff]
      %v289 = vld [vmem:[%s267 + $0x10] sm:$0xff]
      %v290 = vld [vmem:[%s267 + $0x18] sm:$0xff]
      %v293 = vunpack.c.l.b16 %v285
      %v294 = vunpack.c.l.b16 %v286
      %v295 = vpack.c.b16 %v294, %v293
      %v300 = vunpack.c.l.b16 %v287
      %v301 = vunpack.c.h.b16 %v287
      %v302 = vunpack.c.l.b16 %v288
      %v303 = vunpack.c.h.b16 %v288
      %v304 = vunpack.c.l.b16 %v289
      %v305 = vunpack.c.h.b16 %v289
      %v306 = vunpack.c.l.b16 %v290
      %v307 = vunpack.c.h.b16 %v290
      %v308 = vpack.c.b16 %v302, %v300
      %v309 = vpack.c.b16 %v303, %v301
      %v310 = vpack.c.b16 %v306, %v304
      %v311 = vpack.c.b16 %v307, %v305
      %vm316 = vcmask 261120
      %v318 = vsel %vm316, %v295, 0
      %320 = vmatpush.bf16.msra.mxu0 0
      %321 = vmatpush.bf16.msra.mxu0 0
      %322 = vmatpush.bf16.msra.mxu0 0
      %323 = vmatpush.bf16.msra.mxu0 0
      %324 = vmatpush.bf16.msra.mxu0 0
      %325 = vmatpush.bf16.msra.mxu0 0
      %326 = vmatpush.bf16.msra.mxu0 %v310
      %327 = vmatpush.bf16.msra.mxu0 %v308
      %328 = vmatmul.bf16.gmra.mxu0 %v318
      %v329 = vpop.f32.mrf.mxu0
      %v330 = vadd.f32 0.0, %v329
      %v331 = vpop.f32.mrf.mxu0
      %v332 = vadd.f32 0.0, %v331
      %333 = vdwg.mxu0
      %334 = vmatpush.bf16.msra.mxu0 0
      %335 = vmatpush.bf16.msra.mxu0 0
      %336 = vmatpush.bf16.msra.mxu0 0
      %337 = vmatpush.bf16.msra.mxu0 0
      %338 = vmatpush.bf16.msra.mxu0 0
      %339 = vmatpush.bf16.msra.mxu0 0
      %340 = vmatpush.bf16.msra.mxu0 %v311
      %341 = vmatpush.bf16.msra.mxu0 %v309
      %342 = vmatmul.bf16.gmra.mxu0 %v318
      %v343 = vpop.f32.mrf.mxu0
      %v344 = vadd.f32 0.0, %v343
      %v345 = vpop.f32.mrf.mxu0
      %v346 = vadd.f32 0.0, %v345
      %347 = vdwg.mxu0
      %v348 = vmax.f32 %v330, 0.0
      %v349 = vmax.f32 %v344, 0.0
      %v350 = vmax.f32 %v332, 0.0
      %v351 = vmax.f32 %v346, 0.0
      %v352 = vld [vmem:[%s273] sm:$0xff]
      %v353 = vld [vmem:[%s273 + $0x8] sm:$0xff]
      %355 = vset.pattern.permute.xlu0 0
      %356 = vperm.xlu0 %355, %v352
      %v357 = vpop.permute.xlu0 %356
      %360 = vset.pattern.permute.xlu0 0
      %361 = vperm.xlu0 %360, %v353
      %v362 = vpop.permute.xlu0 %361
      %v364 = vmul.f32 %v348, %v357
      %v365 = vmul.f32 %v349, %v357
      %v366 = vmul.f32 %v350, %v362
      %v367 = vmul.f32 %v351, %v362
      %v368 = vpack.c.bf16 %v366, %v364
      %v369 = vpack.c.bf16 %v367, %v365
      %v370 = vld [vmem:[%s3] sm:$0x3]
      %v371 = vld [vmem:[%s4] sm:$0xf]
      %373 = vset.pattern.permute.xlu0 0
      %374 = vperm.xlu0 %373, %v371
      %v375 = vpop.permute.xlu0 %374
      %vm377 = vcmask 130048
      %v379 = vsel %vm377, %v370, 0
      %381 = vmatpush.bf16.msra.mxu0 0
      %382 = vmatpush.bf16.msra.mxu0 0
      %383 = vmatpush.bf16.msra.mxu0 0
      %384 = vmatpush.bf16.msra.mxu0 0
      %385 = vmatpush.bf16.msra.mxu0 0
      %386 = vmatpush.bf16.msra.mxu0 0
      %387 = vmatpush.bf16.msra.mxu0 0
      %388 = vmatpush.bf16.msra.mxu0 %v368
      %389 = vmatmul.bf16.gmra.mxu0 %v379
      %v390 = vpop.f32.mrf.mxu0
      %v391 = vadd.f32 %v375, %v390
      %v392 = vpop.f32.mrf.mxu0
      %393 = vdwg.mxu0
      %394 = vmatpush.bf16.msra.mxu0 0
      %395 = vmatpush.bf16.msra.mxu0 0
      %396 = vmatpush.bf16.msra.mxu0 0
      %397 = vmatpush.bf16.msra.mxu0 0
      %398 = vmatpush.bf16.msra.mxu0 0
      %399 = vmatpush.bf16.msra.mxu0 0
      %400 = vmatpush.bf16.msra.mxu0 0
      %401 = vmatpush.bf16.msra.mxu0 %v369
      %402 = vmatmul.bf16.gmra.mxu0 %v379
      %v403 = vpop.f32.mrf.mxu0
      %v404 = vadd.f32 %v375, %v403
      %v405 = vpop.f32.mrf.mxu0
      %406 = vdwg.mxu0
      %v409 = vrot.slane %v404, 4
      %vm410 = vcmask 1043456
      %v411 = vsel %vm410, %v391, %v409
      %413 = vst [vmem:[%s282] sm:$0xff] %v411
      %s414 = smul.u32 2, %s21
      %p415 = scmp.lt.s32.totalorder %s20, 1
      %s416 = scalar_select %p415, %s20, 1
      %p417 = scmp.lt.s32.totalorder %s414, 1
      %s418 = scalar_select %p417, %s414, 1
      %s419 = smul.addr %s416, 2
      %s420 = sadd.s32 %s418, %s419
      %s421 = smul.addr %s420, 4
      %s422 = scalar_lea.vmem %s5, %s421
      // Predicated region
      $region41: #{lisa3d_forward.3} parent=39 // pred_check
        %p423 = pneg %p165
      $region42: #{lisa3d_forward.3} parent=39 // pred_check_branch
        %425 = sbr.rel (%p423) target = $region44
      $region43: #{lisa3d_forward.3} parent=39 // pred_region
        %s426 = smul.u32 2, %s21
      $region44: #{lisa3d_forward.3} parent=39 // pred_fallthru
        _
    $region40: #{lisa3d_forward.3} parent=5 // pred_fallthru
      _
    %p427 = scmp.le.s32.totalorder 2, %s11
    // Predicated region
    $region45: #{lisa3d_forward.3} parent=5 // pred_check
      %p428 = pneg %p427
    $region46: #{lisa3d_forward.3} parent=5 // pred_check_branch
      %430 = sbr.rel (%p428) target = $region48
    $region47: #{lisa3d_forward.3} parent=5 // pred_region
      %s431 = ssub.s32 %s11, 2
      // Predicated region
      $region49: #{lisa3d_forward.3} parent=47 // pred_check
        %p432 = pneg %p171
      $region50: #{lisa3d_forward.3} parent=47 // pred_check_branch
        %434 = sbr.rel (%p432) target = $region52
      $region51: #{lisa3d_forward.3} parent=47 // pred_region
        %s435 = smul.u32 2, %s23
        %p436 = scmp.lt.s32.totalorder %s22, 1
        %s437 = scalar_select %p436, %s22, 1
        %p438 = scmp.lt.s32.totalorder %s435, 1
        %s439 = scalar_select %p438, %s435, 1
        %s440 = smul.addr %s437, 2
        %s441 = sadd.s32 %s439, %s440
        %s442 = smul.addr %s441, 4
        %s443 = scalar_lea.vmem %s5, %s442
      $region52: #{lisa3d_forward.3} parent=47 // pred_fallthru
        _
    $region48: #{lisa3d_forward.3} parent=5 // pred_fallthru
      _
  $region6: #{lisa3d_forward.3} parent=0 // loop_footer
    %s15 = sadd.s32 1, %s11
  $region7: #{lisa3d_forward.3} parent=0 // loop_footer_branch
    %10 = sbr.rel target = $region3
  $region8: #{lisa3d_forward.3} parent=0 // loop_exit
    _

// kernel: lisa3d_forward.2
$region0: #{lisa3d_forward.2}
  #allocation0 [shape = 'u32[]', space=smem, size = 0x4, offset = 0x4, fixed_abs, tag = 'smem constant byte address 0x4 - core index']
  #allocation1 [shape = 'u32[72,128]{1,0:T(1,128)}', space=vmem, size = 0x9000, scoped, tag = 'internal scratch']
  %s0 = inlined_call_operand.vmem [shape: f32[16,32], index: 0, kind: input, shape index: {}]
  %s1 = inlined_call_operand.vmem [shape: f32[2,16], index: 1, kind: input, shape index: {}]
  %s2 = inlined_call_operand.vmem [shape: f32[2,1], index: 2, kind: input, shape index: {}]
  %s3 = inlined_call_operand.vmem [shape: f32[32,32], index: 3, kind: input, shape index: {}]
  %s4 = inlined_call_operand.vmem [shape: f32[1,32], index: 4, kind: input, shape index: {}]
  %s5 = inlined_call_operand.vmem [shape: f32[32,16], index: 5, kind: input, shape index: {}]
  %s6 = inlined_call_operand.vmem [shape: f32[1,16], index: 6, kind: input, shape index: {}]
  %s7 = inlined_call_operand.vmem [shape: f32[2,16], index: 7, kind: output, shape index: {}]
  %s8 = sld [smem:[#allocation0]]
  $region38: #{lisa3d_forward.2} parent=0
    _
  %s10 = ssub.s32 1, %s8
  %s11 = scalar_select 0, %s10, %s8
  // Predicated region
  $region2: #{lisa3d_forward.2} parent=0 // pred_check
    _
  $region3: #{lisa3d_forward.2} parent=0 // pred_check_branch
    %13 = sbr.rel (0) target = $region5
  $region4: #{lisa3d_forward.2} parent=0 // pred_region
    _
  $region5: #{lisa3d_forward.2} parent=0 // pred_fallthru
    _
  // Predicated region
  $region6: #{lisa3d_forward.2} parent=0 // pred_check
    _
  $region7: #{lisa3d_forward.2} parent=0 // pred_check_branch
    %15 = sbr.rel (0) target = $region9
  $region8: #{lisa3d_forward.2} parent=0 // pred_region
    _
  $region9: #{lisa3d_forward.2} parent=0 // pred_fallthru
    _
  // Predicated region
  $region10: #{lisa3d_forward.2} parent=0 // pred_check
    _
  $region11: #{lisa3d_forward.2} parent=0 // pred_check_branch
    %17 = sbr.rel (0) target = $region13
  $region12: #{lisa3d_forward.2} parent=0 // pred_region
    _
  $region13: #{lisa3d_forward.2} parent=0 // pred_fallthru
    _
  // Predicated region
  $region14: #{lisa3d_forward.2} parent=0 // pred_check
    _
  $region15: #{lisa3d_forward.2} parent=0 // pred_check_branch
    %19 = sbr.rel (0) target = $region17
  $region16: #{lisa3d_forward.2} parent=0 // pred_region
    _
  $region17: #{lisa3d_forward.2} parent=0 // pred_fallthru
    _
  // Predicated region
  $region18: #{lisa3d_forward.2} parent=0 // pred_check
    _
  $region19: #{lisa3d_forward.2} parent=0 // pred_check_branch
    %21 = sbr.rel (0) target = $region21
  $region20: #{lisa3d_forward.2} parent=0 // pred_region
    _
  $region21: #{lisa3d_forward.2} parent=0 // pred_fallthru
    _
  // Predicated region
  $region22: #{lisa3d_forward.2} parent=0 // pred_check
    _
  $region23: #{lisa3d_forward.2} parent=0 // pred_check_branch
    %23 = sbr.rel (0) target = $region25
  $region24: #{lisa3d_forward.2} parent=0 // pred_region
    _
  $region25: #{lisa3d_forward.2} parent=0 // pred_fallthru
    _
  // Predicated region
  $region26: #{lisa3d_forward.2} parent=0 // pred_check
    _
  $region27: #{lisa3d_forward.2} parent=0 // pred_check_branch
    %25 = sbr.rel (0) target = $region29
  $region28: #{lisa3d_forward.2} parent=0 // pred_region
    _
  $region29: #{lisa3d_forward.2} parent=0 // pred_fallthru
    _
  %v26 = vld [vmem:[%s0] sm:$0xff]
  %v27 = vld [vmem:[%s0 + $0x8] sm:$0xff]
  %v28 = vld [vmem:[%s3] sm:$0xff]
  %v29 = vld [vmem:[%s3 + $0x8] sm:$0xff]
  %v30 = vld [vmem:[%s3 + $0x10] sm:$0xff]
  %v31 = vld [vmem:[%s3 + $0x18] sm:$0xff]
  %v32 = vld [vmem:[%s4] sm:$0x1]
  %v34 = vperm.slane %v32, 0
  %vm36 = vcmask 261120
  %v38 = vsel %vm36, %v26, 0
  %v41 = vsel %vm36, %v27, 0
  %43 = vmatpush.msra.mxu0 0.0
  %44 = vmatpush.msra.mxu0 0.0
  %45 = vmatpush.msra.mxu0 0.0
  %46 = vmatpush.msra.mxu0 0.0
  %47 = vmatpush.msra.mxu0 0.0
  %48 = vmatpush.msra.mxu0 0.0
  %49 = vmatpush.msra.mxu0 0.0
  %50 = vmatpush.msra.mxu0 0.0
  %51 = vmatpush.msra.mxu0 0.0
  %52 = vmatpush.msra.mxu0 0.0
  %53 = vmatpush.msra.mxu0 0.0
  %54 = vmatpush.msra.mxu0 0.0
  %55 = vmatpush.msra.mxu0 %v31
  %56 = vmatpush.msra.mxu0 %v30
  %57 = vmatpush.msra.mxu0 %v29
  %58 = vmatpush.msra.mxu0 %v28
  %59 = vmatmul.f32.gmra.mxu0 %v38
  %v60 = vpop.f32.mrf.mxu0
  %v61 = vadd.f32 %v34, %v60
  %62 = vmatmul.f32.gmra.mxu0 %v41
  %v63 = vpop.f32.mrf.mxu0
  %v64 = vadd.f32 %v34, %v63
  %65 = vdwg.mxu0
  %v66 = vtanh.pop %v61
  %v67 = vtanh.pop %v64
  %v68 = vld [vmem:[%s1] sm:$0x3]
  %vm69 = vcmask 130048
  %v71 = vsel %vm69, %v68, 0
  %73 = vmatpush.msra.mxu0 0.0
  %74 = vmatpush.msra.mxu0 0.0
  %75 = vmatpush.msra.mxu0 0.0
  %76 = vmatpush.msra.mxu0 0.0
  %77 = vmatpush.msra.mxu0 0.0
  %78 = vmatpush.msra.mxu0 0.0
  %79 = vmatpush.msra.mxu0 0.0
  %80 = vmatpush.msra.mxu0 0.0
  %81 = vmatpush.msra.mxu0 0.0
  %82 = vmatpush.msra.mxu0 0.0
  %83 = vmatpush.msra.mxu0 0.0
  %84 = vmatpush.msra.mxu0 0.0
  %85 = vmatpush.msra.mxu0 0.0
  %86 = vmatpush.msra.mxu0 0.0
  %87 = vmatpush.msra.mxu0 %v67
  %88 = vmatpush.msra.mxu0 %v66
  %89 = vmatmul.f32.gmra.mxu0 %v71
  %v90 = vpop.f32.mrf.mxu0
  %v91 = vadd.f32 0.0, %v90
  %92 = vdwg.mxu0
  %v93 = vld [vmem:[%s2] sm:$0x3]
  %vm94 = vcmp.gt.f32.partialorder %v93, 0.0
  %v95 = vmax.f32 %v93, 1.0
  %97 = vset.pattern.permute.xlu0 0
  %98 = vperm.xlu0 %97, %v95
  %v99 = vpop.permute.xlu0 %98
  %v101 = vrcp.pop %v99
  %v102 = vmul.f32 %v99, %v101
  %v103 = vsub.f32 1.0, %v102
  %v104 = vmul.f32 %v101, %v103
  %v105 = vadd.f32 %v101, %v104
  %vm106 = vweird.f32 %v99
  %vm107 = vweird.f32 %v101
  %vm108 = vmor %vm106, %vm107
  %v109 = vsel %vm108, %v101, %v105
  %v110 = vand.u32 2147483647, %v99
  %vm111 = vcmp.eq.f32.partialorder %v110, 8.507059e+37
  %v112 = vand.u32 %v99, 2147483648
  %v113 = vor.u32 1.1754944e-38, %v112
  %v114 = vsel %vm111, %v113, %v109
  %v115 = vmul.f32 %v91, %v114
  %v116 = vsel %vm94, 1, 0
  %117 = vset.pattern.permute.xlu0 0
  %118 = vperm.xlu0 %117, %v116
  %v119 = vpop.permute.xlu0 %118
  %vm120 = vcmp.eq.s32.totalorder %v119, 1
  %v121 = vsel %vm120, %v115, 0.0
  %v122 = vld [vmem:[%s5] sm:$0xff]
  %v123 = vld [vmem:[%s5 + $0x8] sm:$0xff]
  %v124 = vld [vmem:[%s5 + $0x10] sm:$0xff]
  %v125 = vld [vmem:[%s5 + $0x18] sm:$0xff]
  %v126 = vld [vmem:[%s6] sm:$0x1]
  %v128 = vperm.slane %v126, 0
  %v131 = vsel %vm36, %v121, 0
  %133 = vmatpush.msra.mxu0 0.0
  %134 = vmatpush.msra.mxu0 0.0
  %135 = vmatpush.msra.mxu0 0.0
  %136 = vmatpush.msra.mxu0 0.0
  %137 = vmatpush.msra.mxu0 0.0
  %138 = vmatpush.msra.mxu0 0.0
  %139 = vmatpush.msra.mxu0 0.0
  %140 = vmatpush.msra.mxu0 0.0
  %141 = vmatpush.msra.mxu0 0.0
  %142 = vmatpush.msra.mxu0 0.0
  %143 = vmatpush.msra.mxu0 0.0
  %144 = vmatpush.msra.mxu0 0.0
  %145 = vmatpush.msra.mxu0 %v125
  %146 = vmatpush.msra.mxu0 %v124
  %147 = vmatpush.msra.mxu0 %v123
  %148 = vmatpush.msra.mxu0 %v122
  %149 = vmatmul.f32.gmra.mxu0 %v131
  %v150 = vpop.f32.mrf.mxu0
  %v151 = vadd.f32 %v128, %v150
  %152 = vdwg.mxu0
  %v153 = vmax.f32 %v151, 0.0
  %vm154 = vcmask 123904
  %155 = vst.msk [vmem:[%s7] sm:$0x3] %vm154, %v153
  // Predicated region
  $region30: #{lisa3d_forward.2} parent=0 // pred_check
    _
  $region31: #{lisa3d_forward.2} parent=0 // pred_check_branch
    %157 = sbr.rel (0) target = $region33
  $region32: #{lisa3d_forward.2} parent=0 // pred_region
    _
  $region33: #{lisa3d_forward.2} parent=0 // pred_fallthru
    _
  // Predicated region
  $region34: #{lisa3d_forward.2} parent=0 // pred_check
    _
  $region35: #{lisa3d_forward.2} parent=0 // pred_check_branch
    %159 = sbr.rel (0) target = $region37
  $region36: #{lisa3d_forward.2} parent=0 // pred_region
    _
  $region37: #{lisa3d_forward.2} parent=0 // pred_fallthru
    _

</llo_original>
